<compile_context>
chip_gen: v6e
topology: v6e:2x2x1
jax: 0.10.0
libtpu: 0.0.40
codegen_flags: <defaults>
</compile_context>

<pallas_src>
import jax
import jax.numpy as jnp
from jax.experimental import pallas as pl
from jax.experimental.pallas import tpu as pltpu

# Explicit scoped-VMEM budget: v7x-safe (64 MiB physical) and far above any block here.
_VMEM_LIMIT = 32 * 1024 * 1024


# ----------------------------- Pallas kernels ------------------------------ #

def _make_conv_stage_kernel(T, with_if):
    """Fused Conv3x3 (single K=9*Cin dot, BN scale folded into weights) + BN shift
    (+ MultiStep IF).  One grid step per batch element; the T loop is unrolled
    in-kernel so the IF membrane is a loop-carried value (never leaves VMEM/vregs).

      x_ref:     (1, T, 9*Cin, N)   N = H*W  (im2col columns, spatial on lanes)
      w_ref:     (Cout, 9*Cin)
      shift_ref: (Cout, 1)  f32     BN shift
      o_ref:     (1, T, Cout, N)    bf16 spikes (with_if) or f32 conv+bn output
    """
    def kernel(x_ref, w_ref, shift_ref, o_ref):
        wmat = w_ref[...]
        shift = shift_ref[...]
        cout = wmat.shape[0]
        n = x_ref.shape[3]
        v = jnp.zeros((cout, n), jnp.float32) if with_if else None
        for t in range(T):                               # static unroll (T is small)
            y = jnp.dot(wmat, x_ref[0, t], preferred_element_type=jnp.float32)
            y = y + shift                                # BN affine (scale folded in w)
            if with_if:
                v = v + y
                spike = (v >= 1.0).astype(jnp.float32)   # v_threshold = 1.0
                v = v - spike                            # soft reset (detach_reset: fwd identical)
                o_ref[0, t] = spike.astype(o_ref.dtype)
            else:
                o_ref[0, t] = y.astype(o_ref.dtype)
    return kernel


def _make_tail_kernel(T, hp, wp, Cf):
    """Fused stage-3 tail: MultiStep IF(x_feat) -> rpe Conv3x3 + BN -> + x_feat.

    Channels-on-lanes layout (Cf = embed_dims is the widest axis here); the
    zero-padded, row-flattened spatial plane lives on sublanes so each 3x3 tap of
    the *in-kernel* spike tensor is a static sublane-offset slice; the 9 taps are
    concatenated along lanes into a single K=9*Cf dot.

      xf_ref:    (1, T, Qf, Cf) f32   padded/flattened x_feat (zeros at pad rows)
      w_ref:     (9*Cf, Cf)     bf16  rpe weights (BN scale folded)
      shift_ref: (1, Cf)        f32
      o_ref:     (1, T, qr, Cf) f32   qr = hp*(wp+2) rows (2 garbage cols per row,
                                      dropped once by the wrapper's final transpose)
    """
    wp2 = wp + 2
    qr = hp * wp2
    qf = (hp + 2) * wp2 + 2
    offs = tuple(dy * wp2 + dx for dy in range(3) for dx in range(3))
    r0 = wp2 + 1                                         # flat offset of interior (0, 0)

    def kernel(xf_ref, w_ref, shift_ref, o_ref):
        wmat = w_ref[...]
        shift = shift_ref[...]
        v = jnp.zeros((qf, Cf), jnp.float32)
        for t in range(T):                               # static unroll
            xf = xf_ref[0, t]                            # (Qf, Cf) f32
            v = v + xf
            spike = (v >= 1.0).astype(jnp.float32)       # pad rows stay 0 forever
            v = v - spike
            # in-kernel im2col of the spikes: 9 static sublane-offset slices
            taps = jnp.concatenate([spike[o:o + qr, :] for o in offs], axis=1)
            y = jnp.dot(taps.astype(wmat.dtype), wmat,
                        preferred_element_type=jnp.float32)          # (qr, Cf)
            o_ref[0, t] = y + shift + xf[r0:r0 + qr, :]               # BN shift + residual
    return kernel


# ------------------------------ layer wrappers ----------------------------- #

def _im2col(x, op_dtype):
    """(B, T, C, H, W) -> (B, T, 9*C, H*W) im2col columns (tap-major, cin-minor).

    Wrapper-side tap stacking: with C <= 32 and tiny frames this is a few KB and
    lets the kernel run one fat K=9*C dot with spatial on lanes."""
    B, T, C, H, W = x.shape
    xp = jnp.pad(x, ((0, 0), (0, 0), (0, 0), (1, 1), (1, 1)))
    taps = [xp[:, :, :, dy:dy + H, dx:dx + W] for dy in range(3) for dx in range(3)]
    col = jnp.stack(taps, axis=2)                        # (B, T, 9, C, H, W)
    return col.reshape(B, T, 9 * C, H * W).astype(op_dtype)


def conv_bn_stage(x, w, scale, shift, *, with_if, op_dtype=jnp.bfloat16):
    """Conv3x3(pad=1, no bias) + BatchNorm(folded) (+ MultiStep IF).

    x: (B, T, Cin, H, W) -> (B, T, Cout, H, W).  Spikes are bf16, conv+bn is f32."""
    B, T, Cin, H, W = x.shape
    Cout = w.shape[-1]
    col = _im2col(x, op_dtype)
    wk = jnp.transpose((w * scale[None, None, None, :]).reshape(9 * Cin, Cout))
    wk = wk.astype(op_dtype)                             # (Cout, 9*Cin), BN scale folded
    sh = shift.reshape(Cout, 1).astype(jnp.float32)
    out_dtype = jnp.bfloat16 if with_if else jnp.float32

    out = pl.pallas_call(
        _make_conv_stage_kernel(T, with_if),
        out_shape=jax.ShapeDtypeStruct((B, T, Cout, H * W), out_dtype),
        grid=(B,),                                       # B parallel -> both TCs on v7x
        in_specs=[
            pl.BlockSpec((1, T, 9 * Cin, H * W), lambda b: (b, 0, 0, 0)),
            pl.BlockSpec((Cout, 9 * Cin), lambda b: (0, 0)),
            pl.BlockSpec((Cout, 1), lambda b: (0, 0)),
        ],
        out_specs=pl.BlockSpec((1, T, Cout, H * W), lambda b: (b, 0, 0, 0)),
        compiler_params=pltpu.CompilerParams(
            dimension_semantics=("parallel",),
            vmem_limit_bytes=_VMEM_LIMIT),
    )(col, wk, sh)
    return out.reshape(B, T, Cout, H, W)


def maxpool3x3s2p1(x, *, neg_inf_pad=False):
    """MaxPool2d(kernel=3, stride=2, padding=1) on (B, T, C, H, W).

    Plain jnp (single fused XLA pass): no extra pallas launch and no 9-tap HBM
    materialization.  0-padding is exact for spike inputs (>= 0); -inf padding is
    used for the signed stage-3 activations."""
    B, T, C, H, W = x.shape
    Ho, Wo = (H + 1) // 2, (W + 1) // 2
    pad_val = -jnp.inf if neg_inf_pad else 0.0
    xp = jnp.pad(x, ((0, 0), (0, 0), (0, 0), (1, 1), (1, 1)), constant_values=pad_val)
    m = None
    for ky in range(3):
        for kx in range(3):
            s = xp[:, :, :, ky:ky + 2 * Ho:2, kx:kx + 2 * Wo:2]
            m = s if m is None else jnp.maximum(m, s)
    return m


def if_rpe_residual(x_feat, w, scale, shift):
    """Fused stage-3 tail: MultiStep IF -> rpe conv + bn -> + x_feat.

    x_feat: (B, T, Cf, hp, wp) f32 -> (T, B, Cf, hp, wp) f32."""
    B, T, Cf, hp, wp = x_feat.shape
    wp2 = wp + 2
    qf = (hp + 2) * wp2 + 2
    qr = hp * wp2
    xf = jnp.transpose(x_feat, (0, 1, 3, 4, 2))                       # (B, T, hp, wp, Cf)
    xf = jnp.pad(xf, ((0, 0), (0, 0), (1, 1), (1, 1), (0, 0)))        # zero spatial pad
    xf = xf.reshape(B, T, (hp + 2) * wp2, Cf)
    xf = jnp.pad(xf, ((0, 0), (0, 0), (0, 2), (0, 0))).astype(jnp.float32)   # (B, T, Qf, Cf)
    wk = (w * scale[None, None, None, :]).reshape(9 * Cf, Cf).astype(jnp.bfloat16)
    sh = shift.reshape(1, Cf).astype(jnp.float32)

    out = pl.pallas_call(
        _make_tail_kernel(T, hp, wp, Cf),
        out_shape=jax.ShapeDtypeStruct((B, T, qr, Cf), jnp.float32),
        grid=(B,),
        in_specs=[
            pl.BlockSpec((1, T, qf, Cf), lambda b: (b, 0, 0, 0)),
            pl.BlockSpec((9 * Cf, Cf), lambda b: (0, 0)),
            pl.BlockSpec((1, Cf), lambda b: (0, 0)),
        ],
        out_specs=pl.BlockSpec((1, T, qr, Cf), lambda b: (b, 0, 0, 0)),
        compiler_params=pltpu.CompilerParams(
            dimension_semantics=("parallel",),
            vmem_limit_bytes=_VMEM_LIMIT),
    )(xf, wk, sh)
    out = out.reshape(B, T, hp, wp2, Cf)[:, :, :, :wp, :]             # drop garbage cols
    return jnp.transpose(out, (1, 0, 4, 2, 3))                        # (T, B, Cf, hp, wp)


# ------------------------------ MS_SPS forward ----------------------------- #

def ms_sps_forward(x_tbchw, params, pooling_stat='1111', patch_size=(4, 4), hook=None):
    T, B, C, H, W = x_tbchw.shape
    x = jnp.transpose(x_tbchw, (1, 0, 2, 3, 4)).astype(jnp.float32)   # (B, T, C, H, W)

    # stages 0-2: fused conv + BN + IF (+ maxpool)
    for s in range(3):
        op_dtype = jnp.float32 if s == 0 else jnp.bfloat16            # stage-0 f32 operands
        x = conv_bn_stage(x, params['w%d' % s], params['scale%d' % s],
                          params['shift%d' % s], with_if=True, op_dtype=op_dtype)
        if pooling_stat[s] == '1':
            x = maxpool3x3s2p1(x)

    # stage 3: conv + BN (no IF), optional maxpool -> x_feat
    x = conv_bn_stage(x, params['w3'], params['scale3'], params['shift3'],
                      with_if=False)
    if pooling_stat[3] == '1':
        x = maxpool3x3s2p1(x, neg_inf_pad=True)

    # fused tail: proj_if3 -> rpe_conv + rpe_bn -> + x_feat
    # NOTE: the reference module defines rpe_if but never applies it in forward.
    out = if_rpe_residual(x, params['w_rpe'], params['scale_rpe'], params['shift_rpe'])
    return out, (H // patch_size[0], W // patch_size[1]), hook


# ------------------------------ parameter init ----------------------------- #

def make_params(key, in_channels=2, embed_dims=32):
    dims = [in_channels, embed_dims // 8, embed_dims // 4,
            embed_dims // 2, embed_dims, embed_dims]
    names = ['0', '1', '2', '3', '_rpe']
    eps = 1e-5
    params = {}
    for i, name in enumerate(names):
        cin, cout = dims[i], dims[i + 1]
        key, k1, k2, k3, k4, k5 = jax.random.split(key, 6)
        w = jax.random.normal(k1, (3, 3, cin, cout), jnp.float32) / jnp.sqrt(9.0 * cin)
        gamma = 1.0 + 0.1 * jax.random.normal(k2, (cout,), jnp.float32)
        beta = 0.1 * jax.random.normal(k3, (cout,), jnp.float32)
        running_mean = 0.1 * jax.random.normal(k4, (cout,), jnp.float32)
        running_var = 1.0 + 0.1 * jax.random.uniform(k5, (cout,), jnp.float32)
        scale = gamma / jnp.sqrt(running_var + eps)
        shift = beta - running_mean * scale
        params['w' + name] = w
        params['scale' + name] = scale
        params['shift' + name] = shift
    return params


# ---------------------------------- main ----------------------------------- #

if __name__ == "__main__":
    key = jax.random.PRNGKey(0)
    kx, kp = jax.random.split(key)
    # small shapes: T=2, B=2, in_channels=2, 16x16 image, embed_dims=32, patch=4
    T, B, C, H, W = 2, 2, 2, 16, 16
    x = jax.random.normal(kx, (T, B, C, H, W), jnp.float32)
    params = make_params(kp, in_channels=C, embed_dims=32)

    out, (Hp, Wp), hook = ms_sps_forward(x, params, pooling_stat='1111',
                                         patch_size=(4, 4), hook=None)
    out = jax.block_until_ready(out)
    assert out.shape == (T, B, 32, 1, 1), out.shape
    assert (Hp, Wp) == (4, 4)
    assert bool(jnp.isfinite(out).all())
    print("KERNEL_OK")
</pallas_src>

<mosaic_0001>
module attributes {stable_mosaic.version = 11 : i64} {
  func.func @kernel(%arg0: i32, %arg1: memref<1x2x18x256xf32, #tpu.memory_space<vmem>>, %arg2: memref<4x18xf32, #tpu.memory_space<vmem>>, %arg3: memref<4x1xf32, #tpu.memory_space<vmem>>, %arg4: memref<1x2x4x256xbf16, #tpu.memory_space<vmem>>) attributes {dimension_semantics = [#tpu.dimension_semantics<parallel>], iteration_bounds = array<i64: 2>, scalar_prefetch = 0 : i64, scratch_operands = 0 : i64, tpu.core_type = #tpu.core_type<tc>, window_params = [{transform_indices = @transform_0, window_bounds = array<i64: 1, 2, 18, 256>}, {pipeline_mode = #tpu.pipeline_mode<synchronous>, transform_indices = @transform_1, window_bounds = array<i64: 4, 18>}, {pipeline_mode = #tpu.pipeline_mode<synchronous>, transform_indices = @transform_2, window_bounds = array<i64: 4, 1>}, {transform_indices = @transform_3, window_bounds = array<i64: 1, 2, 4, 256>}]} {
    %c0 = arith.constant 0 : index
    %c0_0 = arith.constant 0 : index
    %0 = vector.load %arg2[%c0, %c0_0] : memref<4x18xf32, #tpu.memory_space<vmem>>, vector<4x18xf32>
    %c0_1 = arith.constant 0 : index
    %c0_2 = arith.constant 0 : index
    %1 = vector.load %arg3[%c0_1, %c0_2] : memref<4x1xf32, #tpu.memory_space<vmem>>, vector<4x1xf32>
    %cst = arith.constant 0.000000e+00 : f32
    %2 = vector.broadcast %cst : f32 to vector<4x256xf32>
    %c0_3 = arith.constant 0 : index
    %c0_4 = arith.constant 0 : index
    %c0_5 = arith.constant 0 : index
    %c0_6 = arith.constant 0 : index
    %3 = vector.load %arg1[%c0_3, %c0_4, %c0_5, %c0_6] : memref<1x2x18x256xf32, #tpu.memory_space<vmem>>, vector<1x1x18x256xf32>
    %4 = vector.shape_cast %3 : vector<1x1x18x256xf32> to vector<18x256xf32>
    %cst_7 = arith.constant dense<0.000000e+00> : vector<4x256xf32>
    %5 = tpu.matmul %0, %4, %cst_7 {dimension_numbers = #tpu.dot_dimension_numbers<[1], [0], [0], [1], [0, 0, 1, 1], [], []>} : vector<4x18xf32>, vector<18x256xf32>, vector<4x256xf32> -> vector<4x256xf32>
    %6 = vector.broadcast %1 : vector<4x1xf32> to vector<4x256xf32>
    %7 = arith.addf %5, %6 : vector<4x256xf32>
    %8 = arith.addf %2, %7 : vector<4x256xf32>
    %cst_8 = arith.constant 1.000000e+00 : f32
    %9 = vector.broadcast %cst_8 : f32 to vector<4x256xf32>
    %10 = arith.cmpf oge, %8, %9 : vector<4x256xf32>
    %11 = arith.extui %10 : vector<4x256xi1> to vector<4x256xi32>
    %12 = arith.sitofp %11 : vector<4x256xi32> to vector<4x256xf32>
    %13 = arith.subf %8, %12 : vector<4x256xf32>
    %14 = arith.truncf %12 : vector<4x256xf32> to vector<4x256xbf16>
    %c0_9 = arith.constant 0 : index
    %c0_10 = arith.constant 0 : index
    %c0_11 = arith.constant 0 : index
    %c0_12 = arith.constant 0 : index
    %15 = vector.load %arg4[%c0_9, %c0_10, %c0_11, %c0_12] : memref<1x2x4x256xbf16, #tpu.memory_space<vmem>>, vector<1x1x4x256xbf16>
    %16 = vector.shape_cast %15 : vector<1x1x4x256xbf16> to vector<4x256xbf16>
    %17 = vector.shape_cast %14 : vector<4x256xbf16> to vector<1x1x4x256xbf16>
    tpu.vector_store %arg4[%c0_9, %c0_10, %c0_11, %c0_12], %17 {strides = array<i32>} : memref<1x2x4x256xbf16, #tpu.memory_space<vmem>>, vector<1x1x4x256xbf16>,
    %c0_13 = arith.constant 0 : index
    %c1 = arith.constant 1 : index
    %c0_14 = arith.constant 0 : index
    %c0_15 = arith.constant 0 : index
    %18 = vector.load %arg1[%c0_13, %c1, %c0_14, %c0_15] : memref<1x2x18x256xf32, #tpu.memory_space<vmem>>, vector<1x1x18x256xf32>
    %19 = vector.shape_cast %18 : vector<1x1x18x256xf32> to vector<18x256xf32>
    %cst_16 = arith.constant dense<0.000000e+00> : vector<4x256xf32>
    %20 = tpu.matmul %0, %19, %cst_16 {dimension_numbers = #tpu.dot_dimension_numbers<[1], [0], [0], [1], [0, 0, 1, 1], [], []>} : vector<4x18xf32>, vector<18x256xf32>, vector<4x256xf32> -> vector<4x256xf32>
    %21 = vector.broadcast %1 : vector<4x1xf32> to vector<4x256xf32>
    %22 = arith.addf %20, %21 : vector<4x256xf32>
    %23 = arith.addf %13, %22 : vector<4x256xf32>
    %cst_17 = arith.constant 1.000000e+00 : f32
    %24 = vector.broadcast %cst_17 : f32 to vector<4x256xf32>
    %25 = arith.cmpf oge, %23, %24 : vector<4x256xf32>
    %26 = arith.extui %25 : vector<4x256xi1> to vector<4x256xi32>
    %27 = arith.sitofp %26 : vector<4x256xi32> to vector<4x256xf32>
    %28 = arith.truncf %27 : vector<4x256xf32> to vector<4x256xbf16>
    %c0_18 = arith.constant 0 : index
    %c1_19 = arith.constant 1 : index
    %c0_20 = arith.constant 0 : index
    %c0_21 = arith.constant 0 : index
    %29 = vector.load %arg4[%c0_18, %c1_19, %c0_20, %c0_21] : memref<1x2x4x256xbf16, #tpu.memory_space<vmem>>, vector<1x1x4x256xbf16>
    %30 = vector.shape_cast %29 : vector<1x1x4x256xbf16> to vector<4x256xbf16>
    %31 = vector.shape_cast %28 : vector<4x256xbf16> to vector<1x1x4x256xbf16>
    tpu.vector_store %arg4[%c0_18, %c1_19, %c0_20, %c0_21], %31 {strides = array<i32>} : memref<1x2x4x256xbf16, #tpu.memory_space<vmem>>, vector<1x1x4x256xbf16>,
    return
  }
  func.func @transform_0(%arg0: i32) -> (i32, i32, i32, i32) {
    %c0_i32 = arith.constant 0 : i32
    %c0_i32_0 = arith.constant 0 : i32
    %c0_i32_1 = arith.constant 0 : i32
    %c0_i32_2 = arith.constant 0 : i32
    return %arg0, %c0_i32, %c0_i32_0, %c0_i32_1 : i32, i32, i32, i32
  }
  func.func @transform_1(%arg0: i32) -> (i32, i32) {
    %c0_i32 = arith.constant 0 : i32
    %c0_i32_0 = arith.constant 0 : i32
    %c0_i32_1 = arith.constant 0 : i32
    return %c0_i32, %c0_i32_0 : i32, i32
  }
  func.func @transform_2(%arg0: i32) -> (i32, i32) {
    %c0_i32 = arith.constant 0 : i32
    %c0_i32_0 = arith.constant 0 : i32
    %c0_i32_1 = arith.constant 0 : i32
    return %c0_i32, %c0_i32_0 : i32, i32
  }
  func.func @transform_3(%arg0: i32) -> (i32, i32, i32, i32) {
    %c0_i32 = arith.constant 0 : i32
    %c0_i32_0 = arith.constant 0 : i32
    %c0_i32_1 = arith.constant 0 : i32
    %c0_i32_2 = arith.constant 0 : i32
    return %arg0, %c0_i32, %c0_i32_0, %c0_i32_1 : i32, i32, i32, i32
  }
}

</mosaic_0001>

<llo_original>
// kernel: tpu_custom_call.1
$region0: #{tpu_custom_call.1}
  #allocation0 [shape = 'u32[]', space=smem, size = 0x4, offset = 0x4, fixed_abs, tag = 'smem constant byte address 0x4 - core index']
  #allocation1 [shape = 'u32[144,128]{1,0:T(1,128)}', space=vmem, size = 0x12000, scoped, tag = 'internal scratch']
  %s0 = inlined_call_operand.vmem [shape: f32[2,2,18,256], index: 0, kind: input, shape index: {}]
  %s1 = inlined_call_operand.vmem [shape: f32[4,18], index: 1, kind: input, shape index: {}]
  %s2 = inlined_call_operand.vmem [shape: f32[4,1], index: 2, kind: input, shape index: {}]
  %s3 = inlined_call_operand.hbm [shape: bf16[2,2,4,256], index: 3, kind: output, shape index: {}]
  %s4 = sld [smem:[#allocation0]]
  $region45: #{tpu_custom_call.1} parent=0
    _
  %s6 = ssub.s32 1, %s4
  %s7 = scalar_select 0, %s6, %s4
  $region1: #{tpu_custom_call.1} parent=0
    #allocation2 [shape = 'u8[8192]{0}', space=vmem, size = 0x2000, scoped, tag = 'output window, operand 0']
    #allocation3 [shape = 's32[2]{0}', space=sflag, size = 0x8, scoped, tag = 'scoped memory for tpu_custom_call.1']
    %8 = vsyncpa [#allocation3], 0
    %s9 = scalar_lea.sflag [#allocation3], 1
    %10 = vsyncpa %s9, 0
    loop: start=0, step=1, limit=4
    $region2: #{tpu_custom_call.1} parent=1 // loop_pre_header
      _
    $region3: #{tpu_custom_call.1} parent=1 // loop_header
      %s12 = sphi 0, %s16
      %p13 = scmp.ge.s32.totalorder %s12, 4
      %s22 = sphi 0, %s24
      %s25 = sphi 0, %s22
      %s26 = sphi 0, %s25
      %s42 = sphi 0, %s26
      %s46 = sphi 0, %s46
      %s48 = sphi 0, %s46
      %s49 = sphi 0, %s48
      %s63 = sphi 0, %s49
      %s67 = sphi 0, %s67
      %s69 = sphi 0, %s67
      %s70 = sphi 0, %s69
      %s84 = sphi 0, %s70
      %s90 = sphi 0, %s92
      %s93 = sphi 0, %s90
      %s94 = sphi 0, %s93
      %s110 = sphi 0, %s94
    $region4: #{tpu_custom_call.1} parent=1 // loop_header_branch
      %15 = sbr.rel (%p13) target = $region8
    $region5: #{tpu_custom_call.1} parent=1 // loop_body
      %s17 = ssub.s32 %s12, 1
      %s18 = ssub.s32 %s12, 2
      %s19 = sadd.s32 %s12, 1
      %s20 = ssub.s32 %s12, %s19
      %p21 = scmp.eq.s32.totalorder %s20, 0
      %s23 = sadd.s32 %s22, 1
      %s24 = scalar_select %p21, %s22, %s23
      %p27 = pneg %p21
      %p28 = scmp.eq.s32.totalorder %s12, 1
      %p29 = por %p27, %p28
      %p30 = scmp.ne.s32.totalorder %s22, %s25
      %p31 = scmp.eq.s32.totalorder %s12, 0
      %p32 = por %p30, %p31
      %p33 = scmp.ne.s32.totalorder %s22, %s25
      %p34 = scmp.eq.s32.totalorder %s17, 1
      %p35 = por %p33, %p34
      %p36 = scmp.ne.s32.totalorder %s25, %s26
      %p37 = scmp.eq.s32.totalorder %s17, 0
      %p38 = por %p36, %p37
      %p39 = scmp.ne.s32.totalorder %s25, %s26
      %p40 = scmp.eq.s32.totalorder %s18, 1
      %p41 = por %p39, %p40
      %p43 = scmp.ne.s32.totalorder %s26, %s42
      %p44 = scmp.eq.s32.totalorder %s18, 0
      %p45 = por %p43, %p44
      %s47 = sadd.s32 %s46, 1
      %p50 = scmp.eq.s32.totalorder %s12, 1
      %p51 = scmp.ne.s32.totalorder %s46, %s48
      %p52 = scmp.eq.s32.totalorder %s12, 0
      %p53 = por %p51, %p52
      %p54 = scmp.ne.s32.totalorder %s46, %s48
      %p55 = scmp.eq.s32.totalorder %s17, 1
      %p56 = por %p54, %p55
      %p57 = scmp.ne.s32.totalorder %s48, %s49
      %p58 = scmp.eq.s32.totalorder %s17, 0
      %p59 = por %p57, %p58
      %p60 = scmp.ne.s32.totalorder %s48, %s49
      %p61 = scmp.eq.s32.totalorder %s18, 1
      %p62 = por %p60, %p61
      %p64 = scmp.ne.s32.totalorder %s49, %s63
      %p65 = scmp.eq.s32.totalorder %s18, 0
      %p66 = por %p64, %p65
      %s68 = sadd.s32 %s67, 1
      %p71 = scmp.eq.s32.totalorder %s12, 1
      %p72 = scmp.ne.s32.totalorder %s67, %s69
      %p73 = scmp.eq.s32.totalorder %s12, 0
      %p74 = por %p72, %p73
      %p75 = scmp.ne.s32.totalorder %s67, %s69
      %p76 = scmp.eq.s32.totalorder %s17, 1
      %p77 = por %p75, %p76
      %p78 = scmp.ne.s32.totalorder %s69, %s70
      %p79 = scmp.eq.s32.totalorder %s17, 0
      %p80 = por %p78, %p79
      %p81 = scmp.ne.s32.totalorder %s69, %s70
      %p82 = scmp.eq.s32.totalorder %s18, 1
      %p83 = por %p81, %p82
      %p85 = scmp.ne.s32.totalorder %s70, %s84
      %p86 = scmp.eq.s32.totalorder %s18, 0
      %p87 = por %p85, %p86
      %s88 = ssub.s32 %s12, %s19
      %p89 = scmp.eq.s32.totalorder %s88, 0
      %s91 = sadd.s32 %s90, 1
      %s92 = scalar_select %p89, %s90, %s91
      %p95 = pneg %p89
      %p96 = scmp.eq.s32.totalorder %s12, 1
      %p97 = por %p95, %p96
      %p98 = scmp.ne.s32.totalorder %s90, %s93
      %p99 = scmp.eq.s32.totalorder %s12, 0
      %p100 = por %p98, %p99
      %p101 = scmp.ne.s32.totalorder %s90, %s93
      %p102 = scmp.eq.s32.totalorder %s17, 1
      %p103 = por %p101, %p102
      %p104 = scmp.ne.s32.totalorder %s93, %s94
      %p105 = scmp.eq.s32.totalorder %s17, 0
      %p106 = por %p104, %p105
      %p107 = scmp.ne.s32.totalorder %s93, %s94
      %p108 = scmp.eq.s32.totalorder %s18, 1
      %p109 = por %p107, %p108
      %p111 = scmp.ne.s32.totalorder %s94, %s110
      %p112 = scmp.eq.s32.totalorder %s18, 0
      %p113 = por %p111, %p112
      %p114 = scmp.le.s32.totalorder 1, %s12
      %p115 = scmp.lt.s32.totalorder %s12, 3
      %p116 = pnand %p114, %p115
      %p117 = pneg %p116
      // Predicated region
      $region9: #{tpu_custom_call.1} parent=5 // pred_check
        _
      $region10: #{tpu_custom_call.1} parent=5 // pred_check_branch
        %119 = sbr.rel (%p116) target = $region12
      $region11: #{tpu_custom_call.1} parent=5 // pred_region
        %s120 = ssub.s32 %s12, 1
        // Predicated region
        $region13: #{tpu_custom_call.1} parent=11 // pred_check
          %p121 = pneg %p59
        $region14: #{tpu_custom_call.1} parent=11 // pred_check_branch
          %123 = sbr.rel (%p121) target = $region16
        $region15: #{tpu_custom_call.1} parent=11 // pred_region
          _
        $region16: #{tpu_custom_call.1} parent=11 // pred_fallthru
          _
        // Predicated region
        $region17: #{tpu_custom_call.1} parent=11 // pred_check
          %p124 = pneg %p80
        $region18: #{tpu_custom_call.1} parent=11 // pred_check_branch
          %126 = sbr.rel (%p124) target = $region20
        $region19: #{tpu_custom_call.1} parent=11 // pred_region
          _
        $region20: #{tpu_custom_call.1} parent=11 // pred_fallthru
          _
      $region12: #{tpu_custom_call.1} parent=5 // pred_fallthru
        _
      %p127 = scmp.lt.s32.totalorder %s12, 2
      // Predicated region
      $region21: #{tpu_custom_call.1} parent=5 // pred_check
        %p128 = pneg %p127
      $region22: #{tpu_custom_call.1} parent=5 // pred_check_branch
        %130 = sbr.rel (%p128) target = $region24
      $region23: #{tpu_custom_call.1} parent=5 // pred_region
        // Predicated region
        $region25: #{tpu_custom_call.1} parent=23 // pred_check
          %p131 = pneg %p32
        $region26: #{tpu_custom_call.1} parent=23 // pred_check_branch
          %133 = sbr.rel (%p131) target = $region28
        $region27: #{tpu_custom_call.1} parent=23 // pred_region
          %p134 = scmp.lt.s32.totalorder %s12, 1
          %s135 = scalar_select %p134, %s12, 1
          %s136 = smul.addr %s135, 12
          %s137 = smul.addr %s136, 8
          %s138 = scalar_lea.vmem %s0, %s137
        $region28: #{tpu_custom_call.1} parent=23 // pred_fallthru
          _
      $region24: #{tpu_custom_call.1} parent=5 // pred_fallthru
        _
      %p139 = scmp.le.s32.totalorder 1, %s12
      %p140 = scmp.lt.s32.totalorder %s12, 3
      %p141 = pnand %p139, %p140
      %p142 = pneg %p141
      // Predicated region
      $region29: #{tpu_custom_call.1} parent=5 // pred_check
        _
      $region30: #{tpu_custom_call.1} parent=5 // pred_check_branch
        %144 = sbr.rel (%p141) target = $region32
      $region31: #{tpu_custom_call.1} parent=5 // pred_region
        %s145 = ssub.s32 %s12, 1
        %p146 = scmp.lt.s32.totalorder %s17, 1
        %s147 = scalar_select %p146, %s17, 1
        %s148 = smul.addr %s147, 12
        %s149 = smul.addr %s148, 8
        %s150 = scalar_lea.vmem %s0, %s149
        %p151 = pneg %p38
        %p152 = pneg %p35
        %p153 = pneg %p59
        %p154 = pneg %p56
        %p155 = pneg %p80
        %p156 = pneg %p77
        %p157 = pneg %p106
        %p158 = pneg %p103
        %s159 = sand.u32 %s93, 1
        %s160 = scalar_lea.sflag [#allocation3], %s159
        %s161 = sand.u32 %s93, 1
        %s162 = smul.addr %s161, 8
        %s163 = scalar_lea.vmem [#allocation2], %s162
        %p164 = scmp.lt.s32.totalorder %s17, 1
        %s165 = scalar_select %p164, %s17, 1
        %s166 = smul.addr %s165, 12
        %s167 = smul.addr %s166, 8
        %s168 = scalar_lea.vmem %s0, %s167
        %v169 = vld [vmem:[%s1] sm:$0xf]
        %v170 = vld [vmem:[%s2] sm:$0xf]
        %v171 = vld [vmem:[%s168] sm:$0xff]
        %v172 = vld [vmem:[%s168 + $0x8] sm:$0xff]
        %v173 = vld [vmem:[%s168 + $0x10] sm:$0xff]
        %v174 = vld [vmem:[%s168 + $0x18] sm:$0xff]
        %v175 = vld [vmem:[%s168 + $0x20] sm:$0x3]
        %v176 = vld [vmem:[%s168 + $0x28] sm:$0x3]
        %178 = vset.pattern.permute.xlu0 0
        %179 = vperm.xlu0 %178, %v170
        %v180 = vpop.permute.xlu0 %179
        %vm182 = vcmask 146432
        %v184 = vsel %vm182, %v169, 0
        %vm186 = vcmask 1041408
        %v188 = vsel %vm186, %v175, 0
        %v191 = vsel %vm186, %v176, 0
        %193 = vmatprep.subr.mxu0 0.0
        %194 = vmatpush1.msra.mxu0 0.0
        %195 = vmatprep.subr.mxu0 0.0
        %196 = vmatpush1.msra.mxu0 0.0
        %197 = vmatprep.subr.mxu0 0.0
        %198 = vmatpush1.msra.mxu0 0.0
        %199 = vmatprep.subr.mxu0 0.0
        %200 = vmatpush1.msra.mxu0 0.0
        %201 = vmatprep.subr.mxu0 0.0
        %202 = vmatpush1.msra.mxu0 0.0
        %203 = vmatprep.subr.mxu0 0.0
        %204 = vmatpush1.msra.mxu0 0.0
        %205 = vmatprep.subr.mxu0 0.0
        %206 = vmatpush1.msra.mxu0 0.0
        %207 = vmatprep.subr.mxu0 0.0
        %208 = vmatpush1.msra.mxu0 0.0
        %209 = vmatprep.subr.mxu0 0.0
        %210 = vmatpush1.msra.mxu0 0.0
        %211 = vmatprep.subr.mxu0 0.0
        %212 = vmatpush1.msra.mxu0 0.0
        %213 = vmatprep.subr.mxu0 0.0
        %214 = vmatpush1.msra.mxu0 0.0
        %215 = vmatprep.subr.mxu0 0.0
        %216 = vmatpush1.msra.mxu0 0.0
        %217 = vmatprep.subr.mxu0 0.0
        %218 = vmatpush1.msra.mxu0 0.0
        %219 = vmatprep.subr.mxu0 %v191
        %220 = vmatpush1.msra.mxu0 %v188
        %221 = vmatprep.subr.mxu0 %v174
        %222 = vmatpush1.msra.mxu0 %v173
        %223 = vmatprep.subr.mxu0 %v172
        %224 = vmatpush1.msra.mxu0 %v171
        %225 = vmatprep.subr.mxu0 0.0
        %226 = vmatpush2.msra.mxu0 0.0
        %227 = vmatprep.subr.mxu0 0.0
        %228 = vmatpush2.msra.mxu0 0.0
        %229 = vmatprep.subr.mxu0 0.0
        %230 = vmatpush2.msra.mxu0 0.0
        %231 = vmatprep.subr.mxu0 0.0
        %232 = vmatpush2.msra.mxu0 0.0
        %233 = vmatprep.subr.mxu0 0.0
        %234 = vmatpush2.msra.mxu0 0.0
        %235 = vmatprep.subr.mxu0 0.0
        %236 = vmatpush2.msra.mxu0 0.0
        %237 = vmatprep.subr.mxu0 0.0
        %238 = vmatpush2.msra.mxu0 0.0
        %239 = vmatprep.subr.mxu0 0.0
        %240 = vmatpush2.msra.mxu0 0.0
        %241 = vmatprep.subr.mxu0 0.0
        %242 = vmatpush2.msra.mxu0 0.0
        %243 = vmatprep.subr.mxu0 0.0
        %244 = vmatpush2.msra.mxu0 0.0
        %245 = vmatprep.subr.mxu0 0.0
        %246 = vmatpush2.msra.mxu0 0.0
        %247 = vmatprep.subr.mxu0 0.0
        %248 = vmatpush2.msra.mxu0 0.0
        %249 = vmatprep.subr.mxu0 0.0
        %250 = vmatpush2.msra.mxu0 0.0
        %251 = vmatprep.subr.mxu0 0.0
        %252 = vmatpush2.msra.mxu0 0.0
        %253 = vmatprep.subr.mxu0 0.0
        %254 = vmatpush2.msra.mxu0 0.0
        %255 = vmatprep.subr.mxu0 0.0
        %256 = vmatpush2.msra.mxu0 0.0
        %257 = vmatprep.mubr.f32.mxu0 0.0
        %258 = vmatmul.mubr.f32.gmra.mxu0 %v184
        %v259 = vpop.f32.mrf.mxu0
        %v260 = vadd.f32 %v180, %v259
        %v261 = vpop.f32.mrf.mxu0
        %v262 = vadd.f32 %v180, %v261
        %263 = vdwg.mxu0
        %v264 = vadd.f32 %v260, 0.0
        %v265 = vadd.f32 %v262, 0.0
        %vm266 = vcmp.ge.f32.partialorder %v264, 1.0
        %vm267 = vcmp.ge.f32.partialorder %v265, 1.0
        %v268 = vsel %vm266, 1, 0
        %v269 = vsel %vm267, 1, 0
        %v270 = vcvt.s32.f32 %v268
        %v271 = vcvt.s32.f32 %v269
        %v272 = vsub.f32 %v264, %v270
        %v273 = vsub.f32 %v265, %v271
        %v274 = vpack.c.bf16 %v270, %v270
        %v275 = vpack.c.bf16 %v271, %v271
        %v278 = vcombine.low %v274, %v275
        %v280 = vunpack.c.l.s4 1983009808
        %v281 = vunpack.c.0.s8 %v280
        %v282 = vlaneseq
        %v283 = vshrl.u32 %v282, 7
        %v284 = vsub.s32 %v281, %v283
        %v285 = vrot.slane %v278, %v284
        %287 = vst [vmem:[%s163] sm:$0xf] %v285
        %s288 = scalar_lea.vmem %s168, 48
        %v289 = vld [vmem:[%s288] sm:$0xff]
        %v290 = vld [vmem:[%s288 + $0x8] sm:$0xff]
        %v291 = vld [vmem:[%s288 + $0x10] sm:$0xff]
        %v292 = vld [vmem:[%s288 + $0x18] sm:$0xff]
        %v293 = vld [vmem:[%s288 + $0x20] sm:$0x3]
        %v294 = vld [vmem:[%s288 + $0x28] sm:$0x3]
        %v296 = vsel %vm186, %v293, 0
        %v299 = vsel %vm186, %v294, 0
        %301 = vmatprep.subr.mxu0 0.0
        %302 = vmatpush1.msra.mxu0 0.0
        %303 = vmatprep.subr.mxu0 0.0
        %304 = vmatpush1.msra.mxu0 0.0
        %305 = vmatprep.subr.mxu0 0.0
        %306 = vmatpush1.msra.mxu0 0.0
        %307 = vmatprep.subr.mxu0 0.0
        %308 = vmatpush1.msra.mxu0 0.0
        %309 = vmatprep.subr.mxu0 0.0
        %310 = vmatpush1.msra.mxu0 0.0
        %311 = vmatprep.subr.mxu0 0.0
        %312 = vmatpush1.msra.mxu0 0.0
        %313 = vmatprep.subr.mxu0 0.0
        %314 = vmatpush1.msra.mxu0 0.0
        %315 = vmatprep.subr.mxu0 0.0
        %316 = vmatpush1.msra.mxu0 0.0
        %317 = vmatprep.subr.mxu0 0.0
        %318 = vmatpush1.msra.mxu0 0.0
        %319 = vmatprep.subr.mxu0 0.0
        %320 = vmatpush1.msra.mxu0 0.0
        %321 = vmatprep.subr.mxu0 0.0
        %322 = vmatpush1.msra.mxu0 0.0
        %323 = vmatprep.subr.mxu0 0.0
        %324 = vmatpush1.msra.mxu0 0.0
        %325 = vmatprep.subr.mxu0 0.0
        %326 = vmatpush1.msra.mxu0 0.0
        %327 = vmatprep.subr.mxu0 %v299
        %328 = vmatpush1.msra.mxu0 %v296
        %329 = vmatprep.subr.mxu0 %v292
        %330 = vmatpush1.msra.mxu0 %v291
        %331 = vmatprep.subr.mxu0 %v290
        %332 = vmatpush1.msra.mxu0 %v289
        %333 = vmatprep.subr.mxu0 0.0
        %334 = vmatpush2.msra.mxu0 0.0
        %335 = vmatprep.subr.mxu0 0.0
        %336 = vmatpush2.msra.mxu0 0.0
        %337 = vmatprep.subr.mxu0 0.0
        %338 = vmatpush2.msra.mxu0 0.0
        %339 = vmatprep.subr.mxu0 0.0
        %340 = vmatpush2.msra.mxu0 0.0
        %341 = vmatprep.subr.mxu0 0.0
        %342 = vmatpush2.msra.mxu0 0.0
        %343 = vmatprep.subr.mxu0 0.0
        %344 = vmatpush2.msra.mxu0 0.0
        %345 = vmatprep.subr.mxu0 0.0
        %346 = vmatpush2.msra.mxu0 0.0
        %347 = vmatprep.subr.mxu0 0.0
        %348 = vmatpush2.msra.mxu0 0.0
        %349 = vmatprep.subr.mxu0 0.0
        %350 = vmatpush2.msra.mxu0 0.0
        %351 = vmatprep.subr.mxu0 0.0
        %352 = vmatpush2.msra.mxu0 0.0
        %353 = vmatprep.subr.mxu0 0.0
        %354 = vmatpush2.msra.mxu0 0.0
        %355 = vmatprep.subr.mxu0 0.0
        %356 = vmatpush2.msra.mxu0 0.0
        %357 = vmatprep.subr.mxu0 0.0
        %358 = vmatpush2.msra.mxu0 0.0
        %359 = vmatprep.subr.mxu0 0.0
        %360 = vmatpush2.msra.mxu0 0.0
        %361 = vmatprep.subr.mxu0 0.0
        %362 = vmatpush2.msra.mxu0 0.0
        %363 = vmatprep.subr.mxu0 0.0
        %364 = vmatpush2.msra.mxu0 0.0
        %365 = vmatprep.mubr.f32.mxu0 0.0
        %366 = vmatmul.mubr.f32.gmra.mxu0 %v184
        %v367 = vpop.f32.mrf.mxu0
        %v368 = vadd.f32 %v180, %v367
        %v369 = vpop.f32.mrf.mxu0
        %v370 = vadd.f32 %v180, %v369
        %371 = vdwg.mxu0
        %v372 = vadd.f32 %v272, %v368
        %v373 = vadd.f32 %v273, %v370
        %vm374 = vcmp.ge.f32.partialorder %v372, 1.0
        %vm375 = vcmp.ge.f32.partialorder %v373, 1.0
        %v376 = vsel %vm374, 1, 0
        %v377 = vsel %vm375, 1, 0
        %v378 = vcvt.s32.f32 %v376
        %v379 = vcvt.s32.f32 %v377
        %v380 = vpack.c.bf16 %v378, %v378
        %v381 = vpack.c.bf16 %v379, %v379
        %v384 = vcombine.low %v380, %v381
        %v386 = vunpack.c.l.s4 1983009808
        %v387 = vunpack.c.0.s8 %v386
        %v388 = vlaneseq
        %v389 = vshrl.u32 %v388, 7
        %v390 = vsub.s32 %v387, %v389
        %v391 = vrot.slane %v384, %v390
        %s393 = scalar_lea.vmem %s163, 4 [#allocation2]
        %394 = vst [vmem:[%s393] sm:$0xf] %v391
        %s395 = sand.u32 %s93, 1
        %s396 = scalar_lea.sflag [#allocation3], %s395
        %s397 = sand.u32 %s93, 1
        %s398 = smul.addr %s397, 8
        %s399 = scalar_lea.vmem [#allocation2], %s398
        // Predicated region
        $region33: #{tpu_custom_call.1} parent=31 // pred_check
          %p400 = pneg %p103
        $region34: #{tpu_custom_call.1} parent=31 // pred_check_branch
          %402 = sbr.rel (%p400) target = $region36
        $region35: #{tpu_custom_call.1} parent=31 // pred_region
          %s404 = ssub.s32 128, 128
          %405 = vsyncadd %s396, %s404
          %s406 = smul.addr %s17, 4
          %s407 = smul.addr %s406, 32
          %s408 = scalar_lea.hbm %s3, %s407
          %s409 = sshll.u32 %s399, 4
          %s410 = int_to_ptr.vmem [resolvable:$true] %s409
          %415 = dma.vmem_to_hbm [thread:$0]  %s410, 128, %s408, %s396, 64, 64, 4
        $region36: #{tpu_custom_call.1} parent=31 // pred_fallthru
          _
      $region32: #{tpu_custom_call.1} parent=5 // pred_fallthru
        _
      %p416 = scmp.le.s32.totalorder 2, %s12
      // Predicated region
      $region37: #{tpu_custom_call.1} parent=5 // pred_check
        %p417 = pneg %p416
      $region38: #{tpu_custom_call.1} parent=5 // pred_check_branch
        %419 = sbr.rel (%p417) target = $region40
      $region39: #{tpu_custom_call.1} parent=5 // pred_region
        %s420 = ssub.s32 %s12, 2
        // Predicated region
        $region41: #{tpu_custom_call.1} parent=39 // pred_check
          %p421 = pneg %p109
        $region42: #{tpu_custom_call.1} parent=39 // pred_check_branch
          %423 = sbr.rel (%p421) target = $region44
        $region43: #{tpu_custom_call.1} parent=39 // pred_region
          %s424 = sand.u32 %s94, 1
          %s425 = scalar_lea.sflag [#allocation3], %s424
          %s426 = sand.u32 %s94, 1
          %s427 = smul.addr %s426, 8
          %s428 = scalar_lea.vmem [#allocation2], %s427
          %429 = dma.done %s425, 128
        $region44: #{tpu_custom_call.1} parent=39 // pred_fallthru
          _
      $region40: #{tpu_custom_call.1} parent=5 // pred_fallthru
        _
    $region6: #{tpu_custom_call.1} parent=1 // loop_footer
      %s16 = sadd.s32 1, %s12
    $region7: #{tpu_custom_call.1} parent=1 // loop_footer_branch
      %11 = sbr.rel target = $region3
    $region8: #{tpu_custom_call.1} parent=1 // loop_exit
      _
    %430 = vsyncpa [#allocation3], 1
    %s431 = scalar_lea.sflag [#allocation3], 1
    %432 = vsyncpa %s431, 1

</llo_original>
